<compile_context>
chip_gen: v5e
topology: v5e:2x2
jax: 0.10.0
libtpu: 0.0.40
codegen_flags: <defaults>
</compile_context>

<pallas_src>
import jax
import jax.numpy as jnp
from jax.experimental import pallas as pl
from jax.experimental.pallas import tpu as pltpu


def _round_up(n: int, m: int) -> int:
    return (n + m - 1) // m * m


def mlp_kernel(xt_ref, w1_ref, b1_ref, w2_ref, b2_ref, o_ref):
    # fc1 in transposed orientation: (H_pad, D) @ (D, TB) -> (H_pad, TB).
    # Single MXU pass with the batch on the lane (N) dimension.
    h = jnp.dot(w1_ref[...], xt_ref[...], preferred_element_type=jnp.float32)
    # Bias (H_pad, 1) broadcast along lanes + ReLU on the VPU.
    h = jnp.maximum(h + b1_ref[...], 0.0)
    # fc2 as VPU multiply + cross-sublane reduction (avoids a 2nd MXU pass
    # with N=1, K=20). Padded rows of w2 are zero, so they contribute nothing.
    z = jnp.sum(h * w2_ref[...], axis=0, keepdims=True)  # (1, TB), lane-dense
    # Scalar bias from SMEM, then sigmoid (EUP); lane-dense store.
    z = z + b2_ref[0, 0]
    o_ref[...] = jax.nn.sigmoid(z).astype(o_ref.dtype)


def modelo_base_forward(x, fc1_w, fc1_b, fc2_w, fc2_b, *, tb=2048):
    """Forward pass of ModeloBasePyTorch.

    Args (PyTorch parameter conventions):
      x:     (B, D)   input batch
      fc1_w: (H, D)   fc1.weight  (H = 20)
      fc1_b: (H,)     fc1.bias
      fc2_w: (1, H)   fc2.weight
      fc2_b: (1,)     fc2.bias
    Returns: (B, 1) sigmoid output.
    """
    B, D = x.shape
    H = fc1_w.shape[0]

    # ---- layout plumbing (done once per call, outside the kernel) ----------
    H_pad = _round_up(H, 8)                       # sublane-aligned hidden dim
    TB = max(128, min(tb, _round_up(B, 128)))     # lane-dim tile, mult of 128
    B_pad = _round_up(B, TB)

    x_pad = jnp.pad(x, ((0, B_pad - B), (0, 0)))
    xt = x_pad.T                                   # (D, B_pad): batch on lanes
    w1t = jnp.pad(fc1_w, ((0, H_pad - H), (0, 0)))                 # (H_pad, D)
    b1c = jnp.pad(fc1_b, (0, H_pad - H)).reshape(H_pad, 1)         # (H_pad, 1)
    w2c = jnp.pad(fc2_w.reshape(-1), (0, H_pad - H)).reshape(H_pad, 1)
    b2s = fc2_b.reshape(1, 1).astype(jnp.float32)                  # SMEM scalar

    grid = (pl.cdiv(B_pad, TB),)

    out = pl.pallas_call(
        mlp_kernel,
        out_shape=jax.ShapeDtypeStruct((1, B_pad), jnp.float32),
        grid=grid,
        in_specs=[
            # x^T tile: batch on the lane dimension, pipelined over the grid.
            pl.BlockSpec((D, TB), lambda i: (0, i)),
            # Weights/biases: constant block index -> VMEM-resident, no re-DMA.
            pl.BlockSpec((H_pad, D), lambda i: (0, 0)),
            pl.BlockSpec((H_pad, 1), lambda i: (0, 0)),
            pl.BlockSpec((H_pad, 1), lambda i: (0, 0)),
            # Scalar bias in SMEM.
            pl.BlockSpec(memory_space=pltpu.SMEM),
        ],
        # Lane-dense output: (1, TB) blocks of a (1, B_pad) result.
        out_specs=pl.BlockSpec((1, TB), lambda i: (0, i)),
        compiler_params=pltpu.CompilerParams(
            dimension_semantics=("parallel",),       # shard batch across TCs
            vmem_limit_bytes=32 * 1024 * 1024,       # safe on v5e/v6e/v7x
        ),
    )(xt, w1t, b1c, w2c, b2s)

    # Tiny wrapper-side transpose back to the PyTorch (B, 1) shape.
    return out[0, :B].reshape(B, 1)


if __name__ == "__main__":
    INPUT_DIM = 32   # `input_dim` of ModeloBasePyTorch
    HIDDEN = 20      # fixed by the module (fc1 out_features)
    BATCH = 3000     # exercises a 2-step batch grid + ragged-tail padding

    key = jax.random.PRNGKey(0)
    kx, kw1, kb1, kw2, kb2 = jax.random.split(key, 5)

    # Deterministic synthetic parameters (PyTorch default Linear init range:
    # U(-1/sqrt(fan_in), 1/sqrt(fan_in))), in PyTorch (out, in) convention.
    bound1 = 1.0 / jnp.sqrt(INPUT_DIM)
    bound2 = 1.0 / jnp.sqrt(HIDDEN)
    fc1_w = jax.random.uniform(kw1, (HIDDEN, INPUT_DIM), jnp.float32, -bound1, bound1)
    fc1_b = jax.random.uniform(kb1, (HIDDEN,), jnp.float32, -bound1, bound1)
    fc2_w = jax.random.uniform(kw2, (1, HIDDEN), jnp.float32, -bound2, bound2)
    fc2_b = jax.random.uniform(kb2, (1,), jnp.float32, -bound2, bound2)

    x = jax.random.normal(kx, (BATCH, INPUT_DIM), jnp.float32)

    out = modelo_base_forward(x, fc1_w, fc1_b, fc2_w, fc2_b)
    out = jax.block_until_ready(out)

    # Reference in plain JAX (same math as the PyTorch forward), full-precision
    # matmuls so the comparison against the kernel's f32 MXU path is tight.
    hp = jax.lax.Precision.HIGHEST
    ref_h = jnp.maximum(jnp.dot(x, fc1_w.T, precision=hp) + fc1_b, 0.0)
    ref = jax.nn.sigmoid(jnp.dot(ref_h, fc2_w.T, precision=hp) + fc2_b)

    assert out.shape == (BATCH, 1)
    assert jnp.allclose(out, ref, atol=2e-5, rtol=2e-5)

    print("KERNEL_OK")
</pallas_src>

<mosaic_0001>
module attributes {stable_mosaic.version = 11 : i64} {
  func.func @mlp_kernel(%arg0: i32, %arg1: memref<32x2048xf32, #tpu.memory_space<vmem>>, %arg2: memref<24x32xf32, #tpu.memory_space<vmem>>, %arg3: memref<24x1xf32, #tpu.memory_space<vmem>>, %arg4: memref<24x1xf32, #tpu.memory_space<vmem>>, %arg5: memref<1x1xf32, #tpu.memory_space<smem>>, %arg6: memref<1x2048xf32, #tpu.memory_space<vmem>>) attributes {dimension_semantics = [#tpu.dimension_semantics<parallel>], iteration_bounds = array<i64: 2>, scalar_prefetch = 0 : i64, scratch_operands = 0 : i64, tpu.core_type = #tpu.core_type<tc>, window_params = [{transform_indices = @transform_0, window_bounds = array<i64: 32, 2048>}, {pipeline_mode = #tpu.pipeline_mode<synchronous>, transform_indices = @transform_1, window_bounds = array<i64: 24, 32>}, {pipeline_mode = #tpu.pipeline_mode<synchronous>, transform_indices = @transform_2, window_bounds = array<i64: 24, 1>}, {pipeline_mode = #tpu.pipeline_mode<synchronous>, transform_indices = @transform_3, window_bounds = array<i64: 24, 1>}, {transform_indices = @transform_4, window_bounds = array<i64: 1, 1>}, {transform_indices = @transform_5, window_bounds = array<i64: 1, 2048>}]} {
    %c0 = arith.constant 0 : index
    %c0_0 = arith.constant 0 : index
    %0 = vector.load %arg2[%c0, %c0_0] : memref<24x32xf32, #tpu.memory_space<vmem>>, vector<24x32xf32>
    %c0_1 = arith.constant 0 : index
    %c0_2 = arith.constant 0 : index
    %1 = vector.load %arg1[%c0_1, %c0_2] : memref<32x2048xf32, #tpu.memory_space<vmem>>, vector<32x2048xf32>
    %cst = arith.constant dense<0.000000e+00> : vector<24x2048xf32>
    %2 = tpu.matmul %0, %1, %cst {dimension_numbers = #tpu.dot_dimension_numbers<[1], [0], [0], [1], [0, 0, 1, 1], [], []>} : vector<24x32xf32>, vector<32x2048xf32>, vector<24x2048xf32> -> vector<24x2048xf32>
    %c0_3 = arith.constant 0 : index
    %c0_4 = arith.constant 0 : index
    %3 = vector.load %arg3[%c0_3, %c0_4] : memref<24x1xf32, #tpu.memory_space<vmem>>, vector<24x1xf32>
    %4 = vector.broadcast %3 : vector<24x1xf32> to vector<24x2048xf32>
    %5 = arith.addf %2, %4 : vector<24x2048xf32>
    %cst_5 = arith.constant 0.000000e+00 : f32
    %6 = vector.broadcast %cst_5 : f32 to vector<24x2048xf32>
    %7 = arith.maximumf %5, %6 : vector<24x2048xf32>
    %c0_6 = arith.constant 0 : index
    %c0_7 = arith.constant 0 : index
    %8 = vector.load %arg4[%c0_6, %c0_7] : memref<24x1xf32, #tpu.memory_space<vmem>>, vector<24x1xf32>
    %9 = vector.broadcast %8 : vector<24x1xf32> to vector<24x2048xf32>
    %10 = arith.mulf %7, %9 : vector<24x2048xf32>
    %cst_8 = arith.constant dense<0.000000e+00> : vector<2048xf32>
    %11 = vector.multi_reduction <add>, %10, %cst_8 [0] : vector<24x2048xf32> to vector<2048xf32>
    %12 = vector.shape_cast %11 : vector<2048xf32> to vector<1x2048xf32>
    %c0_9 = arith.constant 0 : index
    %c0_10 = arith.constant 0 : index
    %13 = memref.load %arg5[%c0_9, %c0_10] : memref<1x1xf32, #tpu.memory_space<smem>>
    %14 = vector.broadcast %13 : f32 to vector<1x2048xf32>
    %15 = arith.addf %12, %14 : vector<1x2048xf32>
    %16 = arith.negf %15 : vector<1x2048xf32>
    %17 = math.exp %16 : vector<1x2048xf32>
    %cst_11 = arith.constant 1.000000e+00 : f32
    %18 = vector.broadcast %cst_11 : f32 to vector<1x2048xf32>
    %19 = arith.addf %18, %17 : vector<1x2048xf32>
    %20 = arith.divf %18, %19 : vector<1x2048xf32>
    %c0_12 = arith.constant 0 : index
    %c0_13 = arith.constant 0 : index
    %21 = vector.load %arg6[%c0_12, %c0_13] : memref<1x2048xf32, #tpu.memory_space<vmem>>, vector<1x2048xf32>
    tpu.vector_store %arg6[%c0_12, %c0_13], %20 {strides = array<i32>} : memref<1x2048xf32, #tpu.memory_space<vmem>>, vector<1x2048xf32>,
    return
  }
  func.func @transform_0(%arg0: i32) -> (i32, i32) {
    %c0_i32 = arith.constant 0 : i32
    %c0_i32_0 = arith.constant 0 : i32
    return %c0_i32, %arg0 : i32, i32
  }
  func.func @transform_1(%arg0: i32) -> (i32, i32) {
    %c0_i32 = arith.constant 0 : i32
    %c0_i32_0 = arith.constant 0 : i32
    %c0_i32_1 = arith.constant 0 : i32
    return %c0_i32, %c0_i32_0 : i32, i32
  }
  func.func @transform_2(%arg0: i32) -> (i32, i32) {
    %c0_i32 = arith.constant 0 : i32
    %c0_i32_0 = arith.constant 0 : i32
    %c0_i32_1 = arith.constant 0 : i32
    return %c0_i32, %c0_i32_0 : i32, i32
  }
  func.func @transform_3(%arg0: i32) -> (i32, i32) {
    %c0_i32 = arith.constant 0 : i32
    %c0_i32_0 = arith.constant 0 : i32
    %c0_i32_1 = arith.constant 0 : i32
    return %c0_i32, %c0_i32_0 : i32, i32
  }
  func.func @transform_4(%arg0: i32) -> (i32, i32) {
    %c0_i32 = arith.constant 0 : i32
    %c0_i32_0 = arith.constant 0 : i32
    %c0_i32_1 = arith.constant 0 : i32
    return %c0_i32, %c0_i32_0 : i32, i32
  }
  func.func @transform_5(%arg0: i32) -> (i32, i32) {
    %c0_i32 = arith.constant 0 : i32
    %c0_i32_0 = arith.constant 0 : i32
    return %c0_i32, %arg0 : i32, i32
  }
}

</mosaic_0001>

<llo_original>
// kernel: tpu_custom_call.1
$region0: #{tpu_custom_call.1}
  #allocation0 [shape = 'u32[]', space=smem, size = 0x4, offset = 0x4, fixed_abs, tag = 'smem constant byte address 0x4 - core index']
  #allocation1 [shape = 'u32[72,128]{1,0:T(1,128)}', space=vmem, size = 0x9000, scoped, tag = 'internal scratch']
  #allocation2 [shape = 'f32[1,1]{1,0:T(1,128)S(6)}', space=smem, size = 0x200, scoped, tag = 'scoped memory for tpu_custom_call.1']
  %s0 = inlined_call_operand.hbm [shape: f32[32,4096], index: 0, kind: input, shape index: {}]
  %s1 = inlined_call_operand.vmem [shape: f32[24,32], index: 1, kind: input, shape index: {}]
  %s2 = inlined_call_operand.vmem [shape: f32[24,1], index: 2, kind: input, shape index: {}]
  %s3 = inlined_call_operand.vmem [shape: f32[24,1], index: 3, kind: input, shape index: {}]
  %s4 = inlined_call_operand.<no memory space> [shape: f32[1,1], index: 4, kind: input, shape index: {}]
  %s5 = inlined_call_operand.hbm [shape: f32[1,4096], index: 5, kind: output, shape index: {}]
  %s6 = sld [smem:[#allocation0]]
  $region57: #{tpu_custom_call.1} parent=0
    _
  %s8 = ssub.s32 1, %s6
  %s9 = scalar_select 0, %s8, %s6
  %10 = sst [smem:[#allocation2]] %s4
  $region1: #{tpu_custom_call.1} parent=0
    #allocation3 [shape = 'u8[524288]{0}', space=vmem, size = 0x80000, scoped, tag = 'input window, operand 0']
    #allocation4 [shape = 's32[2]{0}', space=sflag, size = 0x8, scoped, tag = 'scoped memory for tpu_custom_call.1']
    #allocation5 [shape = 's32[2]{0}', space=sflag, size = 0x8, scoped, tag = 'scoped memory for tpu_custom_call.1']
    #allocation6 [shape = 'u8[16384]{0}', space=vmem, size = 0x4000, scoped, tag = 'output window, operand 0']
    %11 = vsyncpa [#allocation4], 0
    %s12 = scalar_lea.sflag [#allocation4], 1
    %13 = vsyncpa %s12, 0
    %14 = vsyncpa [#allocation5], 0
    %s15 = scalar_lea.sflag [#allocation5], 1
    %16 = vsyncpa %s15, 0
    loop: start=0, step=1, limit=4
    $region2: #{tpu_custom_call.1} parent=1 // loop_pre_header
      _
    $region3: #{tpu_custom_call.1} parent=1 // loop_header
      %s18 = sphi 0, %s22
      %p19 = scmp.ge.s32.totalorder %s18, 4
      %s28 = sphi 0, %s30
      %s31 = sphi 0, %s28
      %s32 = sphi 0, %s31
      %s48 = sphi 0, %s32
      %s52 = sphi 0, %s52
      %s54 = sphi 0, %s52
      %s55 = sphi 0, %s54
      %s69 = sphi 0, %s55
      %s73 = sphi 0, %s73
      %s75 = sphi 0, %s73
      %s76 = sphi 0, %s75
      %s90 = sphi 0, %s76
      %s94 = sphi 0, %s94
      %s96 = sphi 0, %s94
      %s97 = sphi 0, %s96
      %s111 = sphi 0, %s97
      %s115 = sphi 0, %s115
      %s117 = sphi 0, %s115
      %s118 = sphi 0, %s117
      %s132 = sphi 0, %s118
      %s138 = sphi 0, %s140
      %s141 = sphi 0, %s138
      %s142 = sphi 0, %s141
      %s158 = sphi 0, %s142
    $region4: #{tpu_custom_call.1} parent=1 // loop_header_branch
      %21 = sbr.rel (%p19) target = $region8
    $region5: #{tpu_custom_call.1} parent=1 // loop_body
      %s23 = ssub.s32 %s18, 1
      %s24 = ssub.s32 %s18, 2
      %s25 = sadd.s32 %s18, 1
      %s26 = ssub.s32 %s18, %s25
      %p27 = scmp.eq.s32.totalorder %s26, 0
      %s29 = sadd.s32 %s28, 1
      %s30 = scalar_select %p27, %s28, %s29
      %p33 = pneg %p27
      %p34 = scmp.eq.s32.totalorder %s18, 1
      %p35 = por %p33, %p34
      %p36 = scmp.ne.s32.totalorder %s28, %s31
      %p37 = scmp.eq.s32.totalorder %s18, 0
      %p38 = por %p36, %p37
      %p39 = scmp.ne.s32.totalorder %s28, %s31
      %p40 = scmp.eq.s32.totalorder %s23, 1
      %p41 = por %p39, %p40
      %p42 = scmp.ne.s32.totalorder %s31, %s32
      %p43 = scmp.eq.s32.totalorder %s23, 0
      %p44 = por %p42, %p43
      %p45 = scmp.ne.s32.totalorder %s31, %s32
      %p46 = scmp.eq.s32.totalorder %s24, 1
      %p47 = por %p45, %p46
      %p49 = scmp.ne.s32.totalorder %s32, %s48
      %p50 = scmp.eq.s32.totalorder %s24, 0
      %p51 = por %p49, %p50
      %s53 = sadd.s32 %s52, 1
      %p56 = scmp.eq.s32.totalorder %s18, 1
      %p57 = scmp.ne.s32.totalorder %s52, %s54
      %p58 = scmp.eq.s32.totalorder %s18, 0
      %p59 = por %p57, %p58
      %p60 = scmp.ne.s32.totalorder %s52, %s54
      %p61 = scmp.eq.s32.totalorder %s23, 1
      %p62 = por %p60, %p61
      %p63 = scmp.ne.s32.totalorder %s54, %s55
      %p64 = scmp.eq.s32.totalorder %s23, 0
      %p65 = por %p63, %p64
      %p66 = scmp.ne.s32.totalorder %s54, %s55
      %p67 = scmp.eq.s32.totalorder %s24, 1
      %p68 = por %p66, %p67
      %p70 = scmp.ne.s32.totalorder %s55, %s69
      %p71 = scmp.eq.s32.totalorder %s24, 0
      %p72 = por %p70, %p71
      %s74 = sadd.s32 %s73, 1
      %p77 = scmp.eq.s32.totalorder %s18, 1
      %p78 = scmp.ne.s32.totalorder %s73, %s75
      %p79 = scmp.eq.s32.totalorder %s18, 0
      %p80 = por %p78, %p79
      %p81 = scmp.ne.s32.totalorder %s73, %s75
      %p82 = scmp.eq.s32.totalorder %s23, 1
      %p83 = por %p81, %p82
      %p84 = scmp.ne.s32.totalorder %s75, %s76
      %p85 = scmp.eq.s32.totalorder %s23, 0
      %p86 = por %p84, %p85
      %p87 = scmp.ne.s32.totalorder %s75, %s76
      %p88 = scmp.eq.s32.totalorder %s24, 1
      %p89 = por %p87, %p88
      %p91 = scmp.ne.s32.totalorder %s76, %s90
      %p92 = scmp.eq.s32.totalorder %s24, 0
      %p93 = por %p91, %p92
      %s95 = sadd.s32 %s94, 1
      %p98 = scmp.eq.s32.totalorder %s18, 1
      %p99 = scmp.ne.s32.totalorder %s94, %s96
      %p100 = scmp.eq.s32.totalorder %s18, 0
      %p101 = por %p99, %p100
      %p102 = scmp.ne.s32.totalorder %s94, %s96
      %p103 = scmp.eq.s32.totalorder %s23, 1
      %p104 = por %p102, %p103
      %p105 = scmp.ne.s32.totalorder %s96, %s97
      %p106 = scmp.eq.s32.totalorder %s23, 0
      %p107 = por %p105, %p106
      %p108 = scmp.ne.s32.totalorder %s96, %s97
      %p109 = scmp.eq.s32.totalorder %s24, 1
      %p110 = por %p108, %p109
      %p112 = scmp.ne.s32.totalorder %s97, %s111
      %p113 = scmp.eq.s32.totalorder %s24, 0
      %p114 = por %p112, %p113
      %s116 = sadd.s32 %s115, 1
      %p119 = scmp.eq.s32.totalorder %s18, 1
      %p120 = scmp.ne.s32.totalorder %s115, %s117
      %p121 = scmp.eq.s32.totalorder %s18, 0
      %p122 = por %p120, %p121
      %p123 = scmp.ne.s32.totalorder %s115, %s117
      %p124 = scmp.eq.s32.totalorder %s23, 1
      %p125 = por %p123, %p124
      %p126 = scmp.ne.s32.totalorder %s117, %s118
      %p127 = scmp.eq.s32.totalorder %s23, 0
      %p128 = por %p126, %p127
      %p129 = scmp.ne.s32.totalorder %s117, %s118
      %p130 = scmp.eq.s32.totalorder %s24, 1
      %p131 = por %p129, %p130
      %p133 = scmp.ne.s32.totalorder %s118, %s132
      %p134 = scmp.eq.s32.totalorder %s24, 0
      %p135 = por %p133, %p134
      %s136 = ssub.s32 %s18, %s25
      %p137 = scmp.eq.s32.totalorder %s136, 0
      %s139 = sadd.s32 %s138, 1
      %s140 = scalar_select %p137, %s138, %s139
      %p143 = pneg %p137
      %p144 = scmp.eq.s32.totalorder %s18, 1
      %p145 = por %p143, %p144
      %p146 = scmp.ne.s32.totalorder %s138, %s141
      %p147 = scmp.eq.s32.totalorder %s18, 0
      %p148 = por %p146, %p147
      %p149 = scmp.ne.s32.totalorder %s138, %s141
      %p150 = scmp.eq.s32.totalorder %s23, 1
      %p151 = por %p149, %p150
      %p152 = scmp.ne.s32.totalorder %s141, %s142
      %p153 = scmp.eq.s32.totalorder %s23, 0
      %p154 = por %p152, %p153
      %p155 = scmp.ne.s32.totalorder %s141, %s142
      %p156 = scmp.eq.s32.totalorder %s24, 1
      %p157 = por %p155, %p156
      %p159 = scmp.ne.s32.totalorder %s142, %s158
      %p160 = scmp.eq.s32.totalorder %s24, 0
      %p161 = por %p159, %p160
      %p162 = scmp.le.s32.totalorder 1, %s18
      %p163 = scmp.lt.s32.totalorder %s18, 3
      %p164 = pnand %p162, %p163
      %p165 = pneg %p164
      // Predicated region
      $region9: #{tpu_custom_call.1} parent=5 // pred_check
        _
      $region10: #{tpu_custom_call.1} parent=5 // pred_check_branch
        %167 = sbr.rel (%p164) target = $region12
      $region11: #{tpu_custom_call.1} parent=5 // pred_region
        %s168 = ssub.s32 %s18, 1
        // Predicated region
        $region13: #{tpu_custom_call.1} parent=11 // pred_check
          %p169 = pneg %p65
        $region14: #{tpu_custom_call.1} parent=11 // pred_check_branch
          %171 = sbr.rel (%p169) target = $region16
        $region15: #{tpu_custom_call.1} parent=11 // pred_region
          _
        $region16: #{tpu_custom_call.1} parent=11 // pred_fallthru
          _
        // Predicated region
        $region17: #{tpu_custom_call.1} parent=11 // pred_check
          %p172 = pneg %p86
        $region18: #{tpu_custom_call.1} parent=11 // pred_check_branch
          %174 = sbr.rel (%p172) target = $region20
        $region19: #{tpu_custom_call.1} parent=11 // pred_region
          _
        $region20: #{tpu_custom_call.1} parent=11 // pred_fallthru
          _
        // Predicated region
        $region21: #{tpu_custom_call.1} parent=11 // pred_check
          %p175 = pneg %p107
        $region22: #{tpu_custom_call.1} parent=11 // pred_check_branch
          %177 = sbr.rel (%p175) target = $region24
        $region23: #{tpu_custom_call.1} parent=11 // pred_region
          _
        $region24: #{tpu_custom_call.1} parent=11 // pred_fallthru
          _
        // Predicated region
        $region25: #{tpu_custom_call.1} parent=11 // pred_check
          %p178 = pneg %p128
        $region26: #{tpu_custom_call.1} parent=11 // pred_check_branch
          %180 = sbr.rel (%p178) target = $region28
        $region27: #{tpu_custom_call.1} parent=11 // pred_region
          _
        $region28: #{tpu_custom_call.1} parent=11 // pred_fallthru
          _
      $region12: #{tpu_custom_call.1} parent=5 // pred_fallthru
        _
      %p181 = scmp.lt.s32.totalorder %s18, 2
      // Predicated region
      $region29: #{tpu_custom_call.1} parent=5 // pred_check
        %p182 = pneg %p181
      $region30: #{tpu_custom_call.1} parent=5 // pred_check_branch
        %184 = sbr.rel (%p182) target = $region32
      $region31: #{tpu_custom_call.1} parent=5 // pred_region
        // Predicated region
        $region33: #{tpu_custom_call.1} parent=31 // pred_check
          %p185 = pneg %p38
        $region34: #{tpu_custom_call.1} parent=31 // pred_check_branch
          %187 = sbr.rel (%p185) target = $region36
        $region35: #{tpu_custom_call.1} parent=31 // pred_region
          %s188 = sand.u32 %s28, 1
          %s189 = scalar_lea.sflag [#allocation4], %s188
          %s190 = sand.u32 %s28, 1
          %s191 = smul.addr %s190, 512
          %s192 = scalar_lea.vmem [#allocation3], %s191
          %s193 = smul.u32 16, %s18
          %195 = vsyncadd %s189, 0
          %s196 = smul.addr %s193, 8
          %s197 = scalar_lea.hbm %s0, %s196
          %s198 = sshll.u32 %s197, 4
          %s199 = int_to_ptr.hbm [resolvable:$true] %s198
          %s200 = sshll.u32 %s192, 4
          %s201 = int_to_ptr.vmem [resolvable:$true] %s200
          %206 = dma.hbm_to_vmem [thread:$0]  %s199, 8192, %s201, %s189, 4096, 2048, 128
        $region36: #{tpu_custom_call.1} parent=31 // pred_fallthru
          _
      $region32: #{tpu_custom_call.1} parent=5 // pred_fallthru
        _
      %p207 = scmp.le.s32.totalorder 1, %s18
      %p208 = scmp.lt.s32.totalorder %s18, 3
      %p209 = pnand %p207, %p208
      %p210 = pneg %p209
      // Predicated region
      $region37: #{tpu_custom_call.1} parent=5 // pred_check
        _
      $region38: #{tpu_custom_call.1} parent=5 // pred_check_branch
        %212 = sbr.rel (%p209) target = $region40
      $region39: #{tpu_custom_call.1} parent=5 // pred_region
        %s213 = ssub.s32 %s18, 1
        %s214 = sand.u32 %s31, 1
        %s215 = scalar_lea.sflag [#allocation4], %s214
        %s216 = sand.u32 %s31, 1
        %s217 = smul.addr %s216, 512
        %s218 = scalar_lea.vmem [#allocation3], %s217
        // Predicated region
        $region41: #{tpu_custom_call.1} parent=39 // pred_check
          %p219 = pneg %p44
        $region42: #{tpu_custom_call.1} parent=39 // pred_check_branch
          %221 = sbr.rel (%p219) target = $region44
        $region43: #{tpu_custom_call.1} parent=39 // pred_region
          %223 = dma.done %s215, 8192
        $region44: #{tpu_custom_call.1} parent=39 // pred_fallthru
          _
        %s224 = sand.u32 %s31, 1
        %s225 = scalar_lea.sflag [#allocation4], %s224
        %s226 = sand.u32 %s31, 1
        %s227 = smul.addr %s226, 512
        %s228 = scalar_lea.vmem [#allocation3], %s227
        %p229 = pneg %p44
        %p230 = pneg %p41
        %p231 = pneg %p65
        %p232 = pneg %p62
        %p233 = pneg %p86
        %p234 = pneg %p83
        %p235 = pneg %p107
        %p236 = pneg %p104
        %p237 = pneg %p128
        %p238 = pneg %p125
        %p239 = pneg %p154
        %p240 = pneg %p151
        %s241 = sand.u32 %s141, 1
        %s242 = scalar_lea.sflag [#allocation5], %s241
        %s243 = sand.u32 %s141, 1
        %s244 = smul.addr %s243, 16
        %s245 = scalar_lea.vmem [#allocation6], %s244
        %s246 = smul.u32 16, %s23
        %s247 = smul.u32 16, %s23
        %v248 = vld [vmem:[%s1] sm:$0xff]
        %v249 = vld [vmem:[%s1 + $0x8] sm:$0xff]
        %v250 = vld [vmem:[%s1 + $0x10] sm:$0xff]
        %v251 = vld [vmem:[%s218] sm:$0xff]
        %v252 = vld [vmem:[%s218 + $0x8] sm:$0xff]
        %v253 = vld [vmem:[%s218 + $0x10] sm:$0xff]
        %v254 = vld [vmem:[%s218 + $0x18] sm:$0xff]
        %v255 = vld [vmem:[%s218 + $0x20] sm:$0xff]
        %v256 = vld [vmem:[%s218 + $0x28] sm:$0xff]
        %v257 = vld [vmem:[%s218 + $0x30] sm:$0xff]
        %v258 = vld [vmem:[%s218 + $0x38] sm:$0xff]
        %v259 = vld [vmem:[%s218 + $0x40] sm:$0xff]
        %v260 = vld [vmem:[%s218 + $0x48] sm:$0xff]
        %v261 = vld [vmem:[%s218 + $0x50] sm:$0xff]
        %v262 = vld [vmem:[%s218 + $0x58] sm:$0xff]
        %v263 = vld [vmem:[%s218 + $0x60] sm:$0xff]
        %v264 = vld [vmem:[%s218 + $0x68] sm:$0xff]
        %v265 = vld [vmem:[%s218 + $0x70] sm:$0xff]
        %v266 = vld [vmem:[%s218 + $0x78] sm:$0xff]
        %v267 = vld [vmem:[%s218 + $0x80] sm:$0xff]
        %v268 = vld [vmem:[%s218 + $0x88] sm:$0xff]
        %v269 = vld [vmem:[%s218 + $0x90] sm:$0xff]
        %v270 = vld [vmem:[%s218 + $0x98] sm:$0xff]
        %v271 = vld [vmem:[%s218 + $0xa0] sm:$0xff]
        %v272 = vld [vmem:[%s218 + $0xa8] sm:$0xff]
        %v273 = vld [vmem:[%s218 + $0xb0] sm:$0xff]
        %v274 = vld [vmem:[%s218 + $0xb8] sm:$0xff]
        %v275 = vld [vmem:[%s218 + $0xc0] sm:$0xff]
        %v276 = vld [vmem:[%s218 + $0xc8] sm:$0xff]
        %v277 = vld [vmem:[%s218 + $0xd0] sm:$0xff]
        %v278 = vld [vmem:[%s218 + $0xd8] sm:$0xff]
        %v279 = vld [vmem:[%s218 + $0xe0] sm:$0xff]
        %v280 = vld [vmem:[%s218 + $0xe8] sm:$0xff]
        %v281 = vld [vmem:[%s218 + $0xf0] sm:$0xff]
        %v282 = vld [vmem:[%s218 + $0xf8] sm:$0xff]
        %v283 = vld [vmem:[%s218 + $0x100] sm:$0xff]
        %v284 = vld [vmem:[%s218 + $0x108] sm:$0xff]
        %v285 = vld [vmem:[%s218 + $0x110] sm:$0xff]
        %v286 = vld [vmem:[%s218 + $0x118] sm:$0xff]
        %v287 = vld [vmem:[%s218 + $0x120] sm:$0xff]
        %v288 = vld [vmem:[%s218 + $0x128] sm:$0xff]
        %v289 = vld [vmem:[%s218 + $0x130] sm:$0xff]
        %v290 = vld [vmem:[%s218 + $0x138] sm:$0xff]
        %v291 = vld [vmem:[%s218 + $0x140] sm:$0xff]
        %v292 = vld [vmem:[%s218 + $0x148] sm:$0xff]
        %v293 = vld [vmem:[%s218 + $0x150] sm:$0xff]
        %v294 = vld [vmem:[%s218 + $0x158] sm:$0xff]
        %v295 = vld [vmem:[%s218 + $0x160] sm:$0xff]
        %v296 = vld [vmem:[%s218 + $0x168] sm:$0xff]
        %v297 = vld [vmem:[%s218 + $0x170] sm:$0xff]
        %v298 = vld [vmem:[%s218 + $0x178] sm:$0xff]
        %v299 = vld [vmem:[%s218 + $0x180] sm:$0xff]
        %v300 = vld [vmem:[%s218 + $0x188] sm:$0xff]
        %v301 = vld [vmem:[%s218 + $0x190] sm:$0xff]
        %v302 = vld [vmem:[%s218 + $0x198] sm:$0xff]
        %v303 = vld [vmem:[%s218 + $0x1a0] sm:$0xff]
        %v304 = vld [vmem:[%s218 + $0x1a8] sm:$0xff]
        %v305 = vld [vmem:[%s218 + $0x1b0] sm:$0xff]
        %v306 = vld [vmem:[%s218 + $0x1b8] sm:$0xff]
        %v307 = vld [vmem:[%s218 + $0x1c0] sm:$0xff]
        %v308 = vld [vmem:[%s218 + $0x1c8] sm:$0xff]
        %v309 = vld [vmem:[%s218 + $0x1d0] sm:$0xff]
        %v310 = vld [vmem:[%s218 + $0x1d8] sm:$0xff]
        %v311 = vld [vmem:[%s218 + $0x1e0] sm:$0xff]
        %v312 = vld [vmem:[%s218 + $0x1e8] sm:$0xff]
        %v313 = vld [vmem:[%s218 + $0x1f0] sm:$0xff]
        %v314 = vld [vmem:[%s218 + $0x1f8] sm:$0xff]
        %v315 = vld [vmem:[%s2] sm:$0xff]
        %v316 = vld [vmem:[%s2 + $0x8] sm:$0xff]
        %v317 = vld [vmem:[%s2 + $0x10] sm:$0xff]
        %319 = vset.pattern.permute.xlu0 0
        %320 = vperm.xlu0 %319, %v315
        %v321 = vpop.permute.xlu0 %320
        %324 = vset.pattern.permute.xlu0 0
        %325 = vperm.xlu0 %324, %v316
        %v326 = vpop.permute.xlu0 %325
        %329 = vset.pattern.permute.xlu0 0
        %330 = vperm.xlu0 %329, %v317
        %v331 = vpop.permute.xlu0 %330
        %vm333 = vcmask 261120
        %v335 = vsel %vm333, %v248, 0
        %v338 = vsel %vm333, %v249, 0
        %v341 = vsel %vm333, %v250, 0
        %343 = vmatpush.msra.mxu0 0.0
        %344 = vmatpush.msra.mxu0 0.0
        %345 = vmatpush.msra.mxu0 0.0
        %346 = vmatpush.msra.mxu0 0.0
        %347 = vmatpush.msra.mxu0 0.0
        %348 = vmatpush.msra.mxu0 0.0
        %349 = vmatpush.msra.mxu0 0.0
        %350 = vmatpush.msra.mxu0 0.0
        %351 = vmatpush.msra.mxu0 0.0
        %352 = vmatpush.msra.mxu0 0.0
        %353 = vmatpush.msra.mxu0 0.0
        %354 = vmatpush.msra.mxu0 0.0
        %355 = vmatpush.msra.mxu0 %v299
        %356 = vmatpush.msra.mxu0 %v283
        %357 = vmatpush.msra.mxu0 %v267
        %358 = vmatpush.msra.mxu0 %v251
        %359 = vmatmul.f32.gmra.mxu0 %v335
        %v360 = vpop.f32.mrf.mxu0
        %v361 = vadd.f32 %v321, %v360
        %362 = vmatmul.f32.gmra.mxu0 %v338
        %v363 = vpop.f32.mrf.mxu0
        %v364 = vadd.f32 %v326, %v363
        %365 = vmatmul.f32.gmra.mxu0 %v341
        %v366 = vpop.f32.mrf.mxu0
        %v367 = vadd.f32 %v331, %v366
        %368 = vdwg.mxu0
        %369 = vmatpush.msra.mxu0 0.0
        %370 = vmatpush.msra.mxu0 0.0
        %371 = vmatpush.msra.mxu0 0.0
        %372 = vmatpush.msra.mxu0 0.0
        %373 = vmatpush.msra.mxu0 0.0
        %374 = vmatpush.msra.mxu0 0.0
        %375 = vmatpush.msra.mxu0 0.0
        %376 = vmatpush.msra.mxu0 0.0
        %377 = vmatpush.msra.mxu0 0.0
        %378 = vmatpush.msra.mxu0 0.0
        %379 = vmatpush.msra.mxu0 0.0
        %380 = vmatpush.msra.mxu0 0.0
        %381 = vmatpush.msra.mxu0 %v300
        %382 = vmatpush.msra.mxu0 %v284
        %383 = vmatpush.msra.mxu0 %v268
        %384 = vmatpush.msra.mxu0 %v252
        %385 = vmatmul.f32.gmra.mxu0 %v335
        %v386 = vpop.f32.mrf.mxu0
        %v387 = vadd.f32 %v321, %v386
        %388 = vmatmul.f32.gmra.mxu0 %v338
        %v389 = vpop.f32.mrf.mxu0
        %v390 = vadd.f32 %v326, %v389
        %391 = vmatmul.f32.gmra.mxu0 %v341
        %v392 = vpop.f32.mrf.mxu0
        %v393 = vadd.f32 %v331, %v392
        %394 = vdwg.mxu0
        %395 = vmatpush.msra.mxu0 0.0
        %396 = vmatpush.msra.mxu0 0.0
        %397 = vmatpush.msra.mxu0 0.0
        %398 = vmatpush.msra.mxu0 0.0
        %399 = vmatpush.msra.mxu0 0.0
        %400 = vmatpush.msra.mxu0 0.0
        %401 = vmatpush.msra.mxu0 0.0
        %402 = vmatpush.msra.mxu0 0.0
        %403 = vmatpush.msra.mxu0 0.0
        %404 = vmatpush.msra.mxu0 0.0
        %405 = vmatpush.msra.mxu0 0.0
        %406 = vmatpush.msra.mxu0 0.0
        %407 = vmatpush.msra.mxu0 %v301
        %408 = vmatpush.msra.mxu0 %v285
        %409 = vmatpush.msra.mxu0 %v269
        %410 = vmatpush.msra.mxu0 %v253
        %411 = vmatmul.f32.gmra.mxu0 %v335
        %v412 = vpop.f32.mrf.mxu0
        %v413 = vadd.f32 %v321, %v412
        %414 = vmatmul.f32.gmra.mxu0 %v338
        %v415 = vpop.f32.mrf.mxu0
        %v416 = vadd.f32 %v326, %v415
        %417 = vmatmul.f32.gmra.mxu0 %v341
        %v418 = vpop.f32.mrf.mxu0
        %v419 = vadd.f32 %v331, %v418
        %420 = vdwg.mxu0
        %421 = vmatpush.msra.mxu0 0.0
        %422 = vmatpush.msra.mxu0 0.0
        %423 = vmatpush.msra.mxu0 0.0
        %424 = vmatpush.msra.mxu0 0.0
        %425 = vmatpush.msra.mxu0 0.0
        %426 = vmatpush.msra.mxu0 0.0
        %427 = vmatpush.msra.mxu0 0.0
        %428 = vmatpush.msra.mxu0 0.0
        %429 = vmatpush.msra.mxu0 0.0
        %430 = vmatpush.msra.mxu0 0.0
        %431 = vmatpush.msra.mxu0 0.0
        %432 = vmatpush.msra.mxu0 0.0
        %433 = vmatpush.msra.mxu0 %v302
        %434 = vmatpush.msra.mxu0 %v286
        %435 = vmatpush.msra.mxu0 %v270
        %436 = vmatpush.msra.mxu0 %v254
        %437 = vmatmul.f32.gmra.mxu0 %v335
        %v438 = vpop.f32.mrf.mxu0
        %v439 = vadd.f32 %v321, %v438
        %440 = vmatmul.f32.gmra.mxu0 %v338
        %v441 = vpop.f32.mrf.mxu0
        %v442 = vadd.f32 %v326, %v441
        %443 = vmatmul.f32.gmra.mxu0 %v341
        %v444 = vpop.f32.mrf.mxu0
        %v445 = vadd.f32 %v331, %v444
        %446 = vdwg.mxu0
        %447 = vmatpush.msra.mxu0 0.0
        %448 = vmatpush.msra.mxu0 0.0
        %449 = vmatpush.msra.mxu0 0.0
        %450 = vmatpush.msra.mxu0 0.0
        %451 = vmatpush.msra.mxu0 0.0
        %452 = vmatpush.msra.mxu0 0.0
        %453 = vmatpush.msra.mxu0 0.0
        %454 = vmatpush.msra.mxu0 0.0
        %455 = vmatpush.msra.mxu0 0.0
        %456 = vmatpush.msra.mxu0 0.0
        %457 = vmatpush.msra.mxu0 0.0
        %458 = vmatpush.msra.mxu0 0.0
        %459 = vmatpush.msra.mxu0 %v303
        %460 = vmatpush.msra.mxu0 %v287
        %461 = vmatpush.msra.mxu0 %v271
        %462 = vmatpush.msra.mxu0 %v255
        %463 = vmatmul.f32.gmra.mxu0 %v335
        %v464 = vpop.f32.mrf.mxu0
        %v465 = vadd.f32 %v321, %v464
        %466 = vmatmul.f32.gmra.mxu0 %v338
        %v467 = vpop.f32.mrf.mxu0
        %v468 = vadd.f32 %v326, %v467
        %469 = vmatmul.f32.gmra.mxu0 %v341
        %v470 = vpop.f32.mrf.mxu0
        %v471 = vadd.f32 %v331, %v470
        %472 = vdwg.mxu0
        %473 = vmatpush.msra.mxu0 0.0
        %474 = vmatpush.msra.mxu0 0.0
        %475 = vmatpush.msra.mxu0 0.0
        %476 = vmatpush.msra.mxu0 0.0
        %477 = vmatpush.msra.mxu0 0.0
        %478 = vmatpush.msra.mxu0 0.0
        %479 = vmatpush.msra.mxu0 0.0
        %480 = vmatpush.msra.mxu0 0.0
        %481 = vmatpush.msra.mxu0 0.0
        %482 = vmatpush.msra.mxu0 0.0
        %483 = vmatpush.msra.mxu0 0.0
        %484 = vmatpush.msra.mxu0 0.0
        %485 = vmatpush.msra.mxu0 %v304
        %486 = vmatpush.msra.mxu0 %v288
        %487 = vmatpush.msra.mxu0 %v272
        %488 = vmatpush.msra.mxu0 %v256
        %489 = vmatmul.f32.gmra.mxu0 %v335
        %v490 = vpop.f32.mrf.mxu0
        %v491 = vadd.f32 %v321, %v490
        %492 = vmatmul.f32.gmra.mxu0 %v338
        %v493 = vpop.f32.mrf.mxu0
        %v494 = vadd.f32 %v326, %v493
        %495 = vmatmul.f32.gmra.mxu0 %v341
        %v496 = vpop.f32.mrf.mxu0
        %v497 = vadd.f32 %v331, %v496
        %498 = vdwg.mxu0
        %499 = vmatpush.msra.mxu0 0.0
        %500 = vmatpush.msra.mxu0 0.0
        %501 = vmatpush.msra.mxu0 0.0
        %502 = vmatpush.msra.mxu0 0.0
        %503 = vmatpush.msra.mxu0 0.0
        %504 = vmatpush.msra.mxu0 0.0
        %505 = vmatpush.msra.mxu0 0.0
        %506 = vmatpush.msra.mxu0 0.0
        %507 = vmatpush.msra.mxu0 0.0
        %508 = vmatpush.msra.mxu0 0.0
        %509 = vmatpush.msra.mxu0 0.0
        %510 = vmatpush.msra.mxu0 0.0
        %511 = vmatpush.msra.mxu0 %v305
        %512 = vmatpush.msra.mxu0 %v289
        %513 = vmatpush.msra.mxu0 %v273
        %514 = vmatpush.msra.mxu0 %v257
        %515 = vmatmul.f32.gmra.mxu0 %v335
        %v516 = vpop.f32.mrf.mxu0
        %v517 = vadd.f32 %v321, %v516
        %518 = vmatmul.f32.gmra.mxu0 %v338
        %v519 = vpop.f32.mrf.mxu0
        %v520 = vadd.f32 %v326, %v519
        %521 = vmatmul.f32.gmra.mxu0 %v341
        %v522 = vpop.f32.mrf.mxu0
        %v523 = vadd.f32 %v331, %v522
        %524 = vdwg.mxu0
        %525 = vmatpush.msra.mxu0 0.0
        %526 = vmatpush.msra.mxu0 0.0
        %527 = vmatpush.msra.mxu0 0.0
        %528 = vmatpush.msra.mxu0 0.0
        %529 = vmatpush.msra.mxu0 0.0
        %530 = vmatpush.msra.mxu0 0.0
        %531 = vmatpush.msra.mxu0 0.0
        %532 = vmatpush.msra.mxu0 0.0
        %533 = vmatpush.msra.mxu0 0.0
        %534 = vmatpush.msra.mxu0 0.0
        %535 = vmatpush.msra.mxu0 0.0
        %536 = vmatpush.msra.mxu0 0.0
        %537 = vmatpush.msra.mxu0 %v306
        %538 = vmatpush.msra.mxu0 %v290
        %539 = vmatpush.msra.mxu0 %v274
        %540 = vmatpush.msra.mxu0 %v258
        %541 = vmatmul.f32.gmra.mxu0 %v335
        %v542 = vpop.f32.mrf.mxu0
        %v543 = vadd.f32 %v321, %v542
        %544 = vmatmul.f32.gmra.mxu0 %v338
        %v545 = vpop.f32.mrf.mxu0
        %v546 = vadd.f32 %v326, %v545
        %547 = vmatmul.f32.gmra.mxu0 %v341
        %v548 = vpop.f32.mrf.mxu0
        %v549 = vadd.f32 %v331, %v548
        %550 = vdwg.mxu0
        %551 = vmatpush.msra.mxu0 0.0
        %552 = vmatpush.msra.mxu0 0.0
        %553 = vmatpush.msra.mxu0 0.0
        %554 = vmatpush.msra.mxu0 0.0
        %555 = vmatpush.msra.mxu0 0.0
        %556 = vmatpush.msra.mxu0 0.0
        %557 = vmatpush.msra.mxu0 0.0
        %558 = vmatpush.msra.mxu0 0.0
        %559 = vmatpush.msra.mxu0 0.0
        %560 = vmatpush.msra.mxu0 0.0
        %561 = vmatpush.msra.mxu0 0.0
        %562 = vmatpush.msra.mxu0 0.0
        %563 = vmatpush.msra.mxu0 %v307
        %564 = vmatpush.msra.mxu0 %v291
        %565 = vmatpush.msra.mxu0 %v275
        %566 = vmatpush.msra.mxu0 %v259
        %567 = vmatmul.f32.gmra.mxu0 %v335
        %v568 = vpop.f32.mrf.mxu0
        %v569 = vadd.f32 %v321, %v568
        %570 = vmatmul.f32.gmra.mxu0 %v338
        %v571 = vpop.f32.mrf.mxu0
        %v572 = vadd.f32 %v326, %v571
        %573 = vmatmul.f32.gmra.mxu0 %v341
        %v574 = vpop.f32.mrf.mxu0
        %v575 = vadd.f32 %v331, %v574
        %576 = vdwg.mxu0
        %577 = vmatpush.msra.mxu0 0.0
        %578 = vmatpush.msra.mxu0 0.0
        %579 = vmatpush.msra.mxu0 0.0
        %580 = vmatpush.msra.mxu0 0.0
        %581 = vmatpush.msra.mxu0 0.0
        %582 = vmatpush.msra.mxu0 0.0
        %583 = vmatpush.msra.mxu0 0.0
        %584 = vmatpush.msra.mxu0 0.0
        %585 = vmatpush.msra.mxu0 0.0
        %586 = vmatpush.msra.mxu0 0.0
        %587 = vmatpush.msra.mxu0 0.0
        %588 = vmatpush.msra.mxu0 0.0
        %589 = vmatpush.msra.mxu0 %v308
        %590 = vmatpush.msra.mxu0 %v292
        %591 = vmatpush.msra.mxu0 %v276
        %592 = vmatpush.msra.mxu0 %v260
        %593 = vmatmul.f32.gmra.mxu0 %v335
        %v594 = vpop.f32.mrf.mxu0
        %v595 = vadd.f32 %v321, %v594
        %596 = vmatmul.f32.gmra.mxu0 %v338
        %v597 = vpop.f32.mrf.mxu0
        %v598 = vadd.f32 %v326, %v597
        %599 = vmatmul.f32.gmra.mxu0 %v341
        %v600 = vpop.f32.mrf.mxu0
        %v601 = vadd.f32 %v331, %v600
        %602 = vdwg.mxu0
        %603 = vmatpush.msra.mxu0 0.0
        %604 = vmatpush.msra.mxu0 0.0
        %605 = vmatpush.msra.mxu0 0.0
        %606 = vmatpush.msra.mxu0 0.0
        %607 = vmatpush.msra.mxu0 0.0
        %608 = vmatpush.msra.mxu0 0.0
        %609 = vmatpush.msra.mxu0 0.0
        %610 = vmatpush.msra.mxu0 0.0
        %611 = vmatpush.msra.mxu0 0.0
        %612 = vmatpush.msra.mxu0 0.0
        %613 = vmatpush.msra.mxu0 0.0
        %614 = vmatpush.msra.mxu0 0.0
        %615 = vmatpush.msra.mxu0 %v309
        %616 = vmatpush.msra.mxu0 %v293
        %617 = vmatpush.msra.mxu0 %v277
        %618 = vmatpush.msra.mxu0 %v261
        %619 = vmatmul.f32.gmra.mxu0 %v335
        %v620 = vpop.f32.mrf.mxu0
        %v621 = vadd.f32 %v321, %v620
        %622 = vmatmul.f32.gmra.mxu0 %v338
        %v623 = vpop.f32.mrf.mxu0
        %v624 = vadd.f32 %v326, %v623
        %625 = vmatmul.f32.gmra.mxu0 %v341
        %v626 = vpop.f32.mrf.mxu0
        %v627 = vadd.f32 %v331, %v626
        %628 = vdwg.mxu0
        %629 = vmatpush.msra.mxu0 0.0
        %630 = vmatpush.msra.mxu0 0.0
        %631 = vmatpush.msra.mxu0 0.0
        %632 = vmatpush.msra.mxu0 0.0
        %633 = vmatpush.msra.mxu0 0.0
        %634 = vmatpush.msra.mxu0 0.0
        %635 = vmatpush.msra.mxu0 0.0
        %636 = vmatpush.msra.mxu0 0.0
        %637 = vmatpush.msra.mxu0 0.0
        %638 = vmatpush.msra.mxu0 0.0
        %639 = vmatpush.msra.mxu0 0.0
        %640 = vmatpush.msra.mxu0 0.0
        %641 = vmatpush.msra.mxu0 %v310
        %642 = vmatpush.msra.mxu0 %v294
        %643 = vmatpush.msra.mxu0 %v278
        %644 = vmatpush.msra.mxu0 %v262
        %645 = vmatmul.f32.gmra.mxu0 %v335
        %v646 = vpop.f32.mrf.mxu0
        %v647 = vadd.f32 %v321, %v646
        %648 = vmatmul.f32.gmra.mxu0 %v338
        %v649 = vpop.f32.mrf.mxu0
        %v650 = vadd.f32 %v326, %v649
        %651 = vmatmul.f32.gmra.mxu0 %v341
        %v652 = vpop.f32.mrf.mxu0
        %v653 = vadd.f32 %v331, %v652
        %654 = vdwg.mxu0
        %655 = vmatpush.msra.mxu0 0.0
        %656 = vmatpush.msra.mxu0 0.0
        %657 = vmatpush.msra.mxu0 0.0
        %658 = vmatpush.msra.mxu0 0.0
        %659 = vmatpush.msra.mxu0 0.0
        %660 = vmatpush.msra.mxu0 0.0
        %661 = vmatpush.msra.mxu0 0.0
        %662 = vmatpush.msra.mxu0 0.0
        %663 = vmatpush.msra.mxu0 0.0
        %664 = vmatpush.msra.mxu0 0.0
        %665 = vmatpush.msra.mxu0 0.0
        %666 = vmatpush.msra.mxu0 0.0
        %667 = vmatpush.msra.mxu0 %v311
        %668 = vmatpush.msra.mxu0 %v295
        %669 = vmatpush.msra.mxu0 %v279
        %670 = vmatpush.msra.mxu0 %v263
        %671 = vmatmul.f32.gmra.mxu0 %v335
        %v672 = vpop.f32.mrf.mxu0
        %v673 = vadd.f32 %v321, %v672
        %674 = vmatmul.f32.gmra.mxu0 %v338
        %v675 = vpop.f32.mrf.mxu0
        %v676 = vadd.f32 %v326, %v675
        %677 = vmatmul.f32.gmra.mxu0 %v341
        %v678 = vpop.f32.mrf.mxu0
        %v679 = vadd.f32 %v331, %v678
        %680 = vdwg.mxu0
        %681 = vmatpush.msra.mxu0 0.0
        %682 = vmatpush.msra.mxu0 0.0
        %683 = vmatpush.msra.mxu0 0.0
        %684 = vmatpush.msra.mxu0 0.0
        %685 = vmatpush.msra.mxu0 0.0
        %686 = vmatpush.msra.mxu0 0.0
        %687 = vmatpush.msra.mxu0 0.0
        %688 = vmatpush.msra.mxu0 0.0
        %689 = vmatpush.msra.mxu0 0.0
        %690 = vmatpush.msra.mxu0 0.0
        %691 = vmatpush.msra.mxu0 0.0
        %692 = vmatpush.msra.mxu0 0.0
        %693 = vmatpush.msra.mxu0 %v312
        %694 = vmatpush.msra.mxu0 %v296
        %695 = vmatpush.msra.mxu0 %v280
        %696 = vmatpush.msra.mxu0 %v264
        %697 = vmatmul.f32.gmra.mxu0 %v335
        %v698 = vpop.f32.mrf.mxu0
        %v699 = vadd.f32 %v321, %v698
        %700 = vmatmul.f32.gmra.mxu0 %v338
        %v701 = vpop.f32.mrf.mxu0
        %v702 = vadd.f32 %v326, %v701
        %703 = vmatmul.f32.gmra.mxu0 %v341
        %v704 = vpop.f32.mrf.mxu0
        %v705 = vadd.f32 %v331, %v704
        %706 = vdwg.mxu0
        %707 = vmatpush.msra.mxu0 0.0
        %708 = vmatpush.msra.mxu0 0.0
        %709 = vmatpush.msra.mxu0 0.0
        %710 = vmatpush.msra.mxu0 0.0
        %711 = vmatpush.msra.mxu0 0.0
        %712 = vmatpush.msra.mxu0 0.0
        %713 = vmatpush.msra.mxu0 0.0
        %714 = vmatpush.msra.mxu0 0.0
        %715 = vmatpush.msra.mxu0 0.0
        %716 = vmatpush.msra.mxu0 0.0
        %717 = vmatpush.msra.mxu0 0.0
        %718 = vmatpush.msra.mxu0 0.0
        %719 = vmatpush.msra.mxu0 %v313
        %720 = vmatpush.msra.mxu0 %v297
        %721 = vmatpush.msra.mxu0 %v281
        %722 = vmatpush.msra.mxu0 %v265
        %723 = vmatmul.f32.gmra.mxu0 %v335
        %v724 = vpop.f32.mrf.mxu0
        %v725 = vadd.f32 %v321, %v724
        %726 = vmatmul.f32.gmra.mxu0 %v338
        %v727 = vpop.f32.mrf.mxu0
        %v728 = vadd.f32 %v326, %v727
        %729 = vmatmul.f32.gmra.mxu0 %v341
        %v730 = vpop.f32.mrf.mxu0
        %v731 = vadd.f32 %v331, %v730
        %732 = vdwg.mxu0
        %733 = vmatpush.msra.mxu0 0.0
        %734 = vmatpush.msra.mxu0 0.0
        %735 = vmatpush.msra.mxu0 0.0
        %736 = vmatpush.msra.mxu0 0.0
        %737 = vmatpush.msra.mxu0 0.0
        %738 = vmatpush.msra.mxu0 0.0
        %739 = vmatpush.msra.mxu0 0.0
        %740 = vmatpush.msra.mxu0 0.0
        %741 = vmatpush.msra.mxu0 0.0
        %742 = vmatpush.msra.mxu0 0.0
        %743 = vmatpush.msra.mxu0 0.0
        %744 = vmatpush.msra.mxu0 0.0
        %745 = vmatpush.msra.mxu0 %v314
        %746 = vmatpush.msra.mxu0 %v298
        %747 = vmatpush.msra.mxu0 %v282
        %748 = vmatpush.msra.mxu0 %v266
        %749 = vmatmul.f32.gmra.mxu0 %v335
        %v750 = vpop.f32.mrf.mxu0
        %v751 = vadd.f32 %v321, %v750
        %752 = vmatmul.f32.gmra.mxu0 %v338
        %v753 = vpop.f32.mrf.mxu0
        %v754 = vadd.f32 %v326, %v753
        %755 = vmatmul.f32.gmra.mxu0 %v341
        %v756 = vpop.f32.mrf.mxu0
        %v757 = vadd.f32 %v331, %v756
        %758 = vdwg.mxu0
        %v759 = vmax.f32 %v361, 0.0
        %v760 = vmax.f32 %v387, 0.0
        %v761 = vmax.f32 %v413, 0.0
        %v762 = vmax.f32 %v439, 0.0
        %v763 = vmax.f32 %v465, 0.0
        %v764 = vmax.f32 %v491, 0.0
        %v765 = vmax.f32 %v517, 0.0
        %v766 = vmax.f32 %v543, 0.0
        %v767 = vmax.f32 %v569, 0.0
        %v768 = vmax.f32 %v595, 0.0
        %v769 = vmax.f32 %v621, 0.0
        %v770 = vmax.f32 %v647, 0.0
        %v771 = vmax.f32 %v673, 0.0
        %v772 = vmax.f32 %v699, 0.0
        %v773 = vmax.f32 %v725, 0.0
        %v774 = vmax.f32 %v751, 0.0
        %v775 = vmax.f32 %v364, 0.0
        %v776 = vmax.f32 %v390, 0.0
        %v777 = vmax.f32 %v416, 0.0
        %v778 = vmax.f32 %v442, 0.0
        %v779 = vmax.f32 %v468, 0.0
        %v780 = vmax.f32 %v494, 0.0
        %v781 = vmax.f32 %v520, 0.0
        %v782 = vmax.f32 %v546, 0.0
        %v783 = vmax.f32 %v572, 0.0
        %v784 = vmax.f32 %v598, 0.0
        %v785 = vmax.f32 %v624, 0.0
        %v786 = vmax.f32 %v650, 0.0
        %v787 = vmax.f32 %v676, 0.0
        %v788 = vmax.f32 %v702, 0.0
        %v789 = vmax.f32 %v728, 0.0
        %v790 = vmax.f32 %v754, 0.0
        %v791 = vmax.f32 %v367, 0.0
        %v792 = vmax.f32 %v393, 0.0
        %v793 = vmax.f32 %v419, 0.0
        %v794 = vmax.f32 %v445, 0.0
        %v795 = vmax.f32 %v471, 0.0
        %v796 = vmax.f32 %v497, 0.0
        %v797 = vmax.f32 %v523, 0.0
        %v798 = vmax.f32 %v549, 0.0
        %v799 = vmax.f32 %v575, 0.0
        %v800 = vmax.f32 %v601, 0.0
        %v801 = vmax.f32 %v627, 0.0
        %v802 = vmax.f32 %v653, 0.0
        %v803 = vmax.f32 %v679, 0.0
        %v804 = vmax.f32 %v705, 0.0
        %v805 = vmax.f32 %v731, 0.0
        %v806 = vmax.f32 %v757, 0.0
        %v807 = vld [vmem:[%s3] sm:$0xff]
        %v808 = vld [vmem:[%s3 + $0x8] sm:$0xff]
        %v809 = vld [vmem:[%s3 + $0x10] sm:$0xff]
        %811 = vset.pattern.permute.xlu0 0
        %812 = vperm.xlu0 %811, %v807
        %v813 = vpop.permute.xlu0 %812
        %816 = vset.pattern.permute.xlu0 0
        %817 = vperm.xlu0 %816, %v808
        %v818 = vpop.permute.xlu0 %817
        %821 = vset.pattern.permute.xlu0 0
        %822 = vperm.xlu0 %821, %v809
        %v823 = vpop.permute.xlu0 %822
        %v825 = vmul.f32 %v759, %v813
        %v826 = vmul.f32 %v760, %v813
        %v827 = vmul.f32 %v761, %v813
        %v828 = vmul.f32 %v762, %v813
        %v829 = vmul.f32 %v763, %v813
        %v830 = vmul.f32 %v764, %v813
        %v831 = vmul.f32 %v765, %v813
        %v832 = vmul.f32 %v766, %v813
        %v833 = vmul.f32 %v767, %v813
        %v834 = vmul.f32 %v768, %v813
        %v835 = vmul.f32 %v769, %v813
        %v836 = vmul.f32 %v770, %v813
        %v837 = vmul.f32 %v771, %v813
        %v838 = vmul.f32 %v772, %v813
        %v839 = vmul.f32 %v773, %v813
        %v840 = vmul.f32 %v774, %v813
        %v841 = vmul.f32 %v775, %v818
        %v842 = vmul.f32 %v776, %v818
        %v843 = vmul.f32 %v777, %v818
        %v844 = vmul.f32 %v778, %v818
        %v845 = vmul.f32 %v779, %v818
        %v846 = vmul.f32 %v780, %v818
        %v847 = vmul.f32 %v781, %v818
        %v848 = vmul.f32 %v782, %v818
        %v849 = vmul.f32 %v783, %v818
        %v850 = vmul.f32 %v784, %v818
        %v851 = vmul.f32 %v785, %v818
        %v852 = vmul.f32 %v786, %v818
        %v853 = vmul.f32 %v787, %v818
        %v854 = vmul.f32 %v788, %v818
        %v855 = vmul.f32 %v789, %v818
        %v856 = vmul.f32 %v790, %v818
        %v857 = vmul.f32 %v791, %v823
        %v858 = vmul.f32 %v792, %v823
        %v859 = vmul.f32 %v793, %v823
        %v860 = vmul.f32 %v794, %v823
        %v861 = vmul.f32 %v795, %v823
        %v862 = vmul.f32 %v796, %v823
        %v863 = vmul.f32 %v797, %v823
        %v864 = vmul.f32 %v798, %v823
        %v865 = vmul.f32 %v799, %v823
        %v866 = vmul.f32 %v800, %v823
        %v867 = vmul.f32 %v801, %v823
        %v868 = vmul.f32 %v802, %v823
        %v869 = vmul.f32 %v803, %v823
        %v870 = vmul.f32 %v804, %v823
        %v871 = vmul.f32 %v805, %v823
        %v872 = vmul.f32 %v806, %v823
        %v873 = vadd.f32 %v825, %v841
        %v874 = vadd.f32 %v873, %v857
        %v875 = vrot.slane %v874, 4
        %v876 = vadd.f32 %v874, %v875
        %v877 = vrot.slane %v876, 2
        %v878 = vadd.f32 %v876, %v877
        %v879 = vrot.slane %v878, 1
        %v880 = vadd.f32 %v878, %v879
        %v881 = vadd.f32 %v826, %v842
        %v882 = vadd.f32 %v881, %v858
        %v883 = vrot.slane %v882, 4
        %v884 = vadd.f32 %v882, %v883
        %v885 = vrot.slane %v884, 2
        %v886 = vadd.f32 %v884, %v885
        %v887 = vrot.slane %v886, 1
        %v888 = vadd.f32 %v886, %v887
        %v889 = vadd.f32 %v827, %v843
        %v890 = vadd.f32 %v889, %v859
        %v891 = vrot.slane %v890, 4
        %v892 = vadd.f32 %v890, %v891
        %v893 = vrot.slane %v892, 2
        %v894 = vadd.f32 %v892, %v893
        %v895 = vrot.slane %v894, 1
        %v896 = vadd.f32 %v894, %v895
        %v897 = vadd.f32 %v828, %v844
        %v898 = vadd.f32 %v897, %v860
        %v899 = vrot.slane %v898, 4
        %v900 = vadd.f32 %v898, %v899
        %v901 = vrot.slane %v900, 2
        %v902 = vadd.f32 %v900, %v901
        %v903 = vrot.slane %v902, 1
        %v904 = vadd.f32 %v902, %v903
        %v905 = vadd.f32 %v829, %v845
        %v906 = vadd.f32 %v905, %v861
        %v907 = vrot.slane %v906, 4
        %v908 = vadd.f32 %v906, %v907
        %v909 = vrot.slane %v908, 2
        %v910 = vadd.f32 %v908, %v909
        %v911 = vrot.slane %v910, 1
        %v912 = vadd.f32 %v910, %v911
        %v913 = vadd.f32 %v830, %v846
        %v914 = vadd.f32 %v913, %v862
        %v915 = vrot.slane %v914, 4
        %v916 = vadd.f32 %v914, %v915
        %v917 = vrot.slane %v916, 2
        %v918 = vadd.f32 %v916, %v917
        %v919 = vrot.slane %v918, 1
        %v920 = vadd.f32 %v918, %v919
        %v921 = vadd.f32 %v831, %v847
        %v922 = vadd.f32 %v921, %v863
        %v923 = vrot.slane %v922, 4
        %v924 = vadd.f32 %v922, %v923
        %v925 = vrot.slane %v924, 2
        %v926 = vadd.f32 %v924, %v925
        %v927 = vrot.slane %v926, 1
        %v928 = vadd.f32 %v926, %v927
        %v929 = vadd.f32 %v832, %v848
        %v930 = vadd.f32 %v929, %v864
        %v931 = vrot.slane %v930, 4
        %v932 = vadd.f32 %v930, %v931
        %v933 = vrot.slane %v932, 2
        %v934 = vadd.f32 %v932, %v933
        %v935 = vrot.slane %v934, 1
        %v936 = vadd.f32 %v934, %v935
        %v937 = vadd.f32 %v833, %v849
        %v938 = vadd.f32 %v937, %v865
        %v939 = vrot.slane %v938, 4
        %v940 = vadd.f32 %v938, %v939
        %v941 = vrot.slane %v940, 2
        %v942 = vadd.f32 %v940, %v941
        %v943 = vrot.slane %v942, 1
        %v944 = vadd.f32 %v942, %v943
        %v945 = vadd.f32 %v834, %v850
        %v946 = vadd.f32 %v945, %v866
        %v947 = vrot.slane %v946, 4
        %v948 = vadd.f32 %v946, %v947
        %v949 = vrot.slane %v948, 2
        %v950 = vadd.f32 %v948, %v949
        %v951 = vrot.slane %v950, 1
        %v952 = vadd.f32 %v950, %v951
        %v953 = vadd.f32 %v835, %v851
        %v954 = vadd.f32 %v953, %v867
        %v955 = vrot.slane %v954, 4
        %v956 = vadd.f32 %v954, %v955
        %v957 = vrot.slane %v956, 2
        %v958 = vadd.f32 %v956, %v957
        %v959 = vrot.slane %v958, 1
        %v960 = vadd.f32 %v958, %v959
        %v961 = vadd.f32 %v836, %v852
        %v962 = vadd.f32 %v961, %v868
        %v963 = vrot.slane %v962, 4
        %v964 = vadd.f32 %v962, %v963
        %v965 = vrot.slane %v964, 2
        %v966 = vadd.f32 %v964, %v965
        %v967 = vrot.slane %v966, 1
        %v968 = vadd.f32 %v966, %v967
        %v969 = vadd.f32 %v837, %v853
        %v970 = vadd.f32 %v969, %v869
        %v971 = vrot.slane %v970, 4
        %v972 = vadd.f32 %v970, %v971
        %v973 = vrot.slane %v972, 2
        %v974 = vadd.f32 %v972, %v973
        %v975 = vrot.slane %v974, 1
        %v976 = vadd.f32 %v974, %v975
        %v977 = vadd.f32 %v838, %v854
        %v978 = vadd.f32 %v977, %v870
        %v979 = vrot.slane %v978, 4
        %v980 = vadd.f32 %v978, %v979
        %v981 = vrot.slane %v980, 2
        %v982 = vadd.f32 %v980, %v981
        %v983 = vrot.slane %v982, 1
        %v984 = vadd.f32 %v982, %v983
        %v985 = vadd.f32 %v839, %v855
        %v986 = vadd.f32 %v985, %v871
        %v987 = vrot.slane %v986, 4
        %v988 = vadd.f32 %v986, %v987
        %v989 = vrot.slane %v988, 2
        %v990 = vadd.f32 %v988, %v989
        %v991 = vrot.slane %v990, 1
        %v992 = vadd.f32 %v990, %v991
        %v993 = vadd.f32 %v840, %v856
        %v994 = vadd.f32 %v993, %v872
        %v995 = vrot.slane %v994, 4
        %v996 = vadd.f32 %v994, %v995
        %v997 = vrot.slane %v996, 2
        %v998 = vadd.f32 %v996, %v997
        %v999 = vrot.slane %v998, 1
        %v1000 = vadd.f32 %v998, %v999
        %s1001 = sld [smem:[#allocation2]]
        %v1002 = vstv %s1001
        %v1003 = vadd.f32 %v880, %v1002
        %v1004 = vadd.f32 %v888, %v1002
        %v1005 = vadd.f32 %v896, %v1002
        %v1006 = vadd.f32 %v904, %v1002
        %v1007 = vadd.f32 %v912, %v1002
        %v1008 = vadd.f32 %v920, %v1002
        %v1009 = vadd.f32 %v928, %v1002
        %v1010 = vadd.f32 %v936, %v1002
        %v1011 = vadd.f32 %v944, %v1002
        %v1012 = vadd.f32 %v952, %v1002
        %v1013 = vadd.f32 %v960, %v1002
        %v1014 = vadd.f32 %v968, %v1002
        %v1015 = vadd.f32 %v976, %v1002
        %v1016 = vadd.f32 %v984, %v1002
        %v1017 = vadd.f32 %v992, %v1002
        %v1018 = vadd.f32 %v1000, %v1002
        %v1019 = vxor.u32 %v1003, 2147483648
        %v1020 = vxor.u32 %v1004, 2147483648
        %v1021 = vxor.u32 %v1005, 2147483648
        %v1022 = vxor.u32 %v1006, 2147483648
        %v1023 = vxor.u32 %v1007, 2147483648
        %v1024 = vxor.u32 %v1008, 2147483648
        %v1025 = vxor.u32 %v1009, 2147483648
        %v1026 = vxor.u32 %v1010, 2147483648
        %v1027 = vxor.u32 %v1011, 2147483648
        %v1028 = vxor.u32 %v1012, 2147483648
        %v1029 = vxor.u32 %v1013, 2147483648
        %v1030 = vxor.u32 %v1014, 2147483648
        %v1031 = vxor.u32 %v1015, 2147483648
        %v1032 = vxor.u32 %v1016, 2147483648
        %v1033 = vxor.u32 %v1017, 2147483648
        %v1034 = vxor.u32 %v1018, 2147483648
        %v1035 = vmul.f32 %v1019, 1.442695
        %v1036 = vpow.pop %v1035
        %v1037 = vmul.f32 %v1020, 1.442695
        %v1038 = vpow.pop %v1037
        %v1039 = vmul.f32 %v1021, 1.442695
        %v1040 = vpow.pop %v1039
        %v1041 = vmul.f32 %v1022, 1.442695
        %v1042 = vpow.pop %v1041
        %v1043 = vmul.f32 %v1023, 1.442695
        %v1044 = vpow.pop %v1043
        %v1045 = vmul.f32 %v1024, 1.442695
        %v1046 = vpow.pop %v1045
        %v1047 = vmul.f32 %v1025, 1.442695
        %v1048 = vpow.pop %v1047
        %v1049 = vmul.f32 %v1026, 1.442695
        %v1050 = vpow.pop %v1049
        %v1051 = vmul.f32 %v1027, 1.442695
        %v1052 = vpow.pop %v1051
        %v1053 = vmul.f32 %v1028, 1.442695
        %v1054 = vpow.pop %v1053
        %v1055 = vmul.f32 %v1029, 1.442695
        %v1056 = vpow.pop %v1055
        %v1057 = vmul.f32 %v1030, 1.442695
        %v1058 = vpow.pop %v1057
        %v1059 = vmul.f32 %v1031, 1.442695
        %v1060 = vpow.pop %v1059
        %v1061 = vmul.f32 %v1032, 1.442695
        %v1062 = vpow.pop %v1061
        %v1063 = vmul.f32 %v1033, 1.442695
        %v1064 = vpow.pop %v1063
        %v1065 = vmul.f32 %v1034, 1.442695
        %v1066 = vpow.pop %v1065
        %v1067 = vadd.f32 %v1036, 1.0
        %v1068 = vadd.f32 %v1038, 1.0
        %v1069 = vadd.f32 %v1040, 1.0
        %v1070 = vadd.f32 %v1042, 1.0
        %v1071 = vadd.f32 %v1044, 1.0
        %v1072 = vadd.f32 %v1046, 1.0
        %v1073 = vadd.f32 %v1048, 1.0
        %v1074 = vadd.f32 %v1050, 1.0
        %v1075 = vadd.f32 %v1052, 1.0
        %v1076 = vadd.f32 %v1054, 1.0
        %v1077 = vadd.f32 %v1056, 1.0
        %v1078 = vadd.f32 %v1058, 1.0
        %v1079 = vadd.f32 %v1060, 1.0
        %v1080 = vadd.f32 %v1062, 1.0
        %v1081 = vadd.f32 %v1064, 1.0
        %v1082 = vadd.f32 %v1066, 1.0
        %v1083 = vrcp.pop %v1067
        %v1084 = vmul.f32 %v1067, %v1083
        %v1085 = vsub.f32 1.0, %v1084
        %v1086 = vmul.f32 %v1083, %v1085
        %v1087 = vadd.f32 %v1083, %v1086
        %vm1088 = vweird.f32 %v1067
        %vm1089 = vweird.f32 %v1083
        %vm1090 = vmor %vm1088, %vm1089
        %v1091 = vsel %vm1090, %v1083, %v1087
        %v1092 = vand.u32 2147483647, %v1067
        %vm1093 = vcmp.eq.f32.partialorder %v1092, 8.507059e+37
        %v1094 = vand.u32 %v1067, 2147483648
        %v1095 = vor.u32 1.1754944e-38, %v1094
        %v1096 = vsel %vm1093, %v1095, %v1091
        %v1097 = vmul.f32 1.0, %v1096
        %v1098 = vrcp.pop %v1068
        %v1099 = vmul.f32 %v1068, %v1098
        %v1100 = vsub.f32 1.0, %v1099
        %v1101 = vmul.f32 %v1098, %v1100
        %v1102 = vadd.f32 %v1098, %v1101
        %vm1103 = vweird.f32 %v1068
        %vm1104 = vweird.f32 %v1098
        %vm1105 = vmor %vm1103, %vm1104
        %v1106 = vsel %vm1105, %v1098, %v1102
        %v1107 = vand.u32 2147483647, %v1068
        %vm1108 = vcmp.eq.f32.partialorder %v1107, 8.507059e+37
        %v1109 = vand.u32 %v1068, 2147483648
        %v1110 = vor.u32 1.1754944e-38, %v1109
        %v1111 = vsel %vm1108, %v1110, %v1106
        %v1112 = vmul.f32 1.0, %v1111
        %v1113 = vrcp.pop %v1069
        %v1114 = vmul.f32 %v1069, %v1113
        %v1115 = vsub.f32 1.0, %v1114
        %v1116 = vmul.f32 %v1113, %v1115
        %v1117 = vadd.f32 %v1113, %v1116
        %vm1118 = vweird.f32 %v1069
        %vm1119 = vweird.f32 %v1113
        %vm1120 = vmor %vm1118, %vm1119
        %v1121 = vsel %vm1120, %v1113, %v1117
        %v1122 = vand.u32 2147483647, %v1069
        %vm1123 = vcmp.eq.f32.partialorder %v1122, 8.507059e+37
        %v1124 = vand.u32 %v1069, 2147483648
        %v1125 = vor.u32 1.1754944e-38, %v1124
        %v1126 = vsel %vm1123, %v1125, %v1121
        %v1127 = vmul.f32 1.0, %v1126
        %v1128 = vrcp.pop %v1070
        %v1129 = vmul.f32 %v1070, %v1128
        %v1130 = vsub.f32 1.0, %v1129
        %v1131 = vmul.f32 %v1128, %v1130
        %v1132 = vadd.f32 %v1128, %v1131
        %vm1133 = vweird.f32 %v1070
        %vm1134 = vweird.f32 %v1128
        %vm1135 = vmor %vm1133, %vm1134
        %v1136 = vsel %vm1135, %v1128, %v1132
        %v1137 = vand.u32 2147483647, %v1070
        %vm1138 = vcmp.eq.f32.partialorder %v1137, 8.507059e+37
        %v1139 = vand.u32 %v1070, 2147483648
        %v1140 = vor.u32 1.1754944e-38, %v1139
        %v1141 = vsel %vm1138, %v1140, %v1136
        %v1142 = vmul.f32 1.0, %v1141
        %v1143 = vrcp.pop %v1071
        %v1144 = vmul.f32 %v1071, %v1143
        %v1145 = vsub.f32 1.0, %v1144
        %v1146 = vmul.f32 %v1143, %v1145
        %v1147 = vadd.f32 %v1143, %v1146
        %vm1148 = vweird.f32 %v1071
        %vm1149 = vweird.f32 %v1143
        %vm1150 = vmor %vm1148, %vm1149
        %v1151 = vsel %vm1150, %v1143, %v1147
        %v1152 = vand.u32 2147483647, %v1071
        %vm1153 = vcmp.eq.f32.partialorder %v1152, 8.507059e+37
        %v1154 = vand.u32 %v1071, 2147483648
        %v1155 = vor.u32 1.1754944e-38, %v1154
        %v1156 = vsel %vm1153, %v1155, %v1151
        %v1157 = vmul.f32 1.0, %v1156
        %v1158 = vrcp.pop %v1072
        %v1159 = vmul.f32 %v1072, %v1158
        %v1160 = vsub.f32 1.0, %v1159
        %v1161 = vmul.f32 %v1158, %v1160
        %v1162 = vadd.f32 %v1158, %v1161
        %vm1163 = vweird.f32 %v1072
        %vm1164 = vweird.f32 %v1158
        %vm1165 = vmor %vm1163, %vm1164
        %v1166 = vsel %vm1165, %v1158, %v1162
        %v1167 = vand.u32 2147483647, %v1072
        %vm1168 = vcmp.eq.f32.partialorder %v1167, 8.507059e+37
        %v1169 = vand.u32 %v1072, 2147483648
        %v1170 = vor.u32 1.1754944e-38, %v1169
        %v1171 = vsel %vm1168, %v1170, %v1166
        %v1172 = vmul.f32 1.0, %v1171
        %v1173 = vrcp.pop %v1073
        %v1174 = vmul.f32 %v1073, %v1173
        %v1175 = vsub.f32 1.0, %v1174
        %v1176 = vmul.f32 %v1173, %v1175
        %v1177 = vadd.f32 %v1173, %v1176
        %vm1178 = vweird.f32 %v1073
        %vm1179 = vweird.f32 %v1173
        %vm1180 = vmor %vm1178, %vm1179
        %v1181 = vsel %vm1180, %v1173, %v1177
        %v1182 = vand.u32 2147483647, %v1073
        %vm1183 = vcmp.eq.f32.partialorder %v1182, 8.507059e+37
        %v1184 = vand.u32 %v1073, 2147483648
        %v1185 = vor.u32 1.1754944e-38, %v1184
        %v1186 = vsel %vm1183, %v1185, %v1181
        %v1187 = vmul.f32 1.0, %v1186
        %v1188 = vrcp.pop %v1074
        %v1189 = vmul.f32 %v1074, %v1188
        %v1190 = vsub.f32 1.0, %v1189
        %v1191 = vmul.f32 %v1188, %v1190
        %v1192 = vadd.f32 %v1188, %v1191
        %vm1193 = vweird.f32 %v1074
        %vm1194 = vweird.f32 %v1188
        %vm1195 = vmor %vm1193, %vm1194
        %v1196 = vsel %vm1195, %v1188, %v1192
        %v1197 = vand.u32 2147483647, %v1074
        %vm1198 = vcmp.eq.f32.partialorder %v1197, 8.507059e+37
        %v1199 = vand.u32 %v1074, 2147483648
        %v1200 = vor.u32 1.1754944e-38, %v1199
        %v1201 = vsel %vm1198, %v1200, %v1196
        %v1202 = vmul.f32 1.0, %v1201
        %v1203 = vrcp.pop %v1075
        %v1204 = vmul.f32 %v1075, %v1203
        %v1205 = vsub.f32 1.0, %v1204
        %v1206 = vmul.f32 %v1203, %v1205
        %v1207 = vadd.f32 %v1203, %v1206
        %vm1208 = vweird.f32 %v1075
        %vm1209 = vweird.f32 %v1203
        %vm1210 = vmor %vm1208, %vm1209
        %v1211 = vsel %vm1210, %v1203, %v1207
        %v1212 = vand.u32 2147483647, %v1075
        %vm1213 = vcmp.eq.f32.partialorder %v1212, 8.507059e+37
        %v1214 = vand.u32 %v1075, 2147483648
        %v1215 = vor.u32 1.1754944e-38, %v1214
        %v1216 = vsel %vm1213, %v1215, %v1211
        %v1217 = vmul.f32 1.0, %v1216
        %v1218 = vrcp.pop %v1076
        %v1219 = vmul.f32 %v1076, %v1218
        %v1220 = vsub.f32 1.0, %v1219
        %v1221 = vmul.f32 %v1218, %v1220
        %v1222 = vadd.f32 %v1218, %v1221
        %vm1223 = vweird.f32 %v1076
        %vm1224 = vweird.f32 %v1218
        %vm1225 = vmor %vm1223, %vm1224
        %v1226 = vsel %vm1225, %v1218, %v1222
        %v1227 = vand.u32 2147483647, %v1076
        %vm1228 = vcmp.eq.f32.partialorder %v1227, 8.507059e+37
        %v1229 = vand.u32 %v1076, 2147483648
        %v1230 = vor.u32 1.1754944e-38, %v1229
        %v1231 = vsel %vm1228, %v1230, %v1226
        %v1232 = vmul.f32 1.0, %v1231
        %v1233 = vrcp.pop %v1077
        %v1234 = vmul.f32 %v1077, %v1233
        %v1235 = vsub.f32 1.0, %v1234
        %v1236 = vmul.f32 %v1233, %v1235
        %v1237 = vadd.f32 %v1233, %v1236
        %vm1238 = vweird.f32 %v1077
        %vm1239 = vweird.f32 %v1233
        %vm1240 = vmor %vm1238, %vm1239
        %v1241 = vsel %vm1240, %v1233, %v1237
        %v1242 = vand.u32 2147483647, %v1077
        %vm1243 = vcmp.eq.f32.partialorder %v1242, 8.507059e+37
        %v1244 = vand.u32 %v1077, 2147483648
        %v1245 = vor.u32 1.1754944e-38, %v1244
        %v1246 = vsel %vm1243, %v1245, %v1241
        %v1247 = vmul.f32 1.0, %v1246
        %v1248 = vrcp.pop %v1078
        %v1249 = vmul.f32 %v1078, %v1248
        %v1250 = vsub.f32 1.0, %v1249
        %v1251 = vmul.f32 %v1248, %v1250
        %v1252 = vadd.f32 %v1248, %v1251
        %vm1253 = vweird.f32 %v1078
        %vm1254 = vweird.f32 %v1248
        %vm1255 = vmor %vm1253, %vm1254
        %v1256 = vsel %vm1255, %v1248, %v1252
        %v1257 = vand.u32 2147483647, %v1078
        %vm1258 = vcmp.eq.f32.partialorder %v1257, 8.507059e+37
        %v1259 = vand.u32 %v1078, 2147483648
        %v1260 = vor.u32 1.1754944e-38, %v1259
        %v1261 = vsel %vm1258, %v1260, %v1256
        %v1262 = vmul.f32 1.0, %v1261
        %v1263 = vrcp.pop %v1079
        %v1264 = vmul.f32 %v1079, %v1263
        %v1265 = vsub.f32 1.0, %v1264
        %v1266 = vmul.f32 %v1263, %v1265
        %v1267 = vadd.f32 %v1263, %v1266
        %vm1268 = vweird.f32 %v1079
        %vm1269 = vweird.f32 %v1263
        %vm1270 = vmor %vm1268, %vm1269
        %v1271 = vsel %vm1270, %v1263, %v1267
        %v1272 = vand.u32 2147483647, %v1079
        %vm1273 = vcmp.eq.f32.partialorder %v1272, 8.507059e+37
        %v1274 = vand.u32 %v1079, 2147483648
        %v1275 = vor.u32 1.1754944e-38, %v1274
        %v1276 = vsel %vm1273, %v1275, %v1271
        %v1277 = vmul.f32 1.0, %v1276
        %v1278 = vrcp.pop %v1080
        %v1279 = vmul.f32 %v1080, %v1278
        %v1280 = vsub.f32 1.0, %v1279
        %v1281 = vmul.f32 %v1278, %v1280
        %v1282 = vadd.f32 %v1278, %v1281
        %vm1283 = vweird.f32 %v1080
        %vm1284 = vweird.f32 %v1278
        %vm1285 = vmor %vm1283, %vm1284
        %v1286 = vsel %vm1285, %v1278, %v1282
        %v1287 = vand.u32 2147483647, %v1080
        %vm1288 = vcmp.eq.f32.partialorder %v1287, 8.507059e+37
        %v1289 = vand.u32 %v1080, 2147483648
        %v1290 = vor.u32 1.1754944e-38, %v1289
        %v1291 = vsel %vm1288, %v1290, %v1286
        %v1292 = vmul.f32 1.0, %v1291
        %v1293 = vrcp.pop %v1081
        %v1294 = vmul.f32 %v1081, %v1293
        %v1295 = vsub.f32 1.0, %v1294
        %v1296 = vmul.f32 %v1293, %v1295
        %v1297 = vadd.f32 %v1293, %v1296
        %vm1298 = vweird.f32 %v1081
        %vm1299 = vweird.f32 %v1293
        %vm1300 = vmor %vm1298, %vm1299
        %v1301 = vsel %vm1300, %v1293, %v1297
        %v1302 = vand.u32 2147483647, %v1081
        %vm1303 = vcmp.eq.f32.partialorder %v1302, 8.507059e+37
        %v1304 = vand.u32 %v1081, 2147483648
        %v1305 = vor.u32 1.1754944e-38, %v1304
        %v1306 = vsel %vm1303, %v1305, %v1301
        %v1307 = vmul.f32 1.0, %v1306
        %v1308 = vrcp.pop %v1082
        %v1309 = vmul.f32 %v1082, %v1308
        %v1310 = vsub.f32 1.0, %v1309
        %v1311 = vmul.f32 %v1308, %v1310
        %v1312 = vadd.f32 %v1308, %v1311
        %vm1313 = vweird.f32 %v1082
        %vm1314 = vweird.f32 %v1308
        %vm1315 = vmor %vm1313, %vm1314
        %v1316 = vsel %vm1315, %v1308, %v1312
        %v1317 = vand.u32 2147483647, %v1082
        %vm1318 = vcmp.eq.f32.partialorder %v1317, 8.507059e+37
        %v1319 = vand.u32 %v1082, 2147483648
        %v1320 = vor.u32 1.1754944e-38, %v1319
        %v1321 = vsel %vm1318, %v1320, %v1316
        %v1322 = vmul.f32 1.0, %v1321
        %v1339 = vrot.slane %v1112, 7
        %v1340 = vrot.slane %v1127, 6
        %v1341 = vrot.slane %v1142, 5
        %v1342 = vrot.slane %v1157, 4
        %v1343 = vrot.slane %v1172, 3
        %v1344 = vrot.slane %v1187, 2
        %v1345 = vrot.slane %v1202, 1
        %v1346 = vrot.slane %v1232, 7
        %v1347 = vrot.slane %v1247, 6
        %v1348 = vrot.slane %v1262, 5
        %v1349 = vrot.slane %v1277, 4
        %v1350 = vrot.slane %v1292, 3
        %v1351 = vrot.slane %v1307, 2
        %v1352 = vrot.slane %v1322, 1
        %vm1353 = vcmask 1040384
        %v1354 = vsel %vm1353, %v1097, %v1339
        %vm1355 = vcmask 1042434
        %v1356 = vsel %vm1355, %v1340, %v1341
        %vm1357 = vcmask 1041408
        %v1358 = vsel %vm1357, %v1354, %v1356
        %vm1359 = vcmask 1044484
        %v1360 = vsel %vm1359, %v1342, %v1343
        %vm1361 = vcmask 1046534
        %v1362 = vsel %vm1361, %v1344, %v1345
        %vm1363 = vcmask 1045508
        %v1364 = vsel %vm1363, %v1360, %v1362
        %vm1365 = vcmask 1043456
        %v1366 = vsel %vm1365, %v1358, %v1364
        %v1367 = vsel %vm1353, %v1217, %v1346
        %v1368 = vsel %vm1355, %v1347, %v1348
        %v1369 = vsel %vm1357, %v1367, %v1368
        %v1370 = vsel %vm1359, %v1349, %v1350
        %v1371 = vsel %vm1361, %v1351, %v1352
        %v1372 = vsel %vm1363, %v1370, %v1371
        %v1373 = vsel %vm1365, %v1369, %v1372
        %1376 = vst [vmem:[%s245] sm:$0xff] %v1366
        %1377 = vst [vmem:[%s245 + $0x8] sm:$0xff] %v1373
        %s1378 = sand.u32 %s141, 1
        %s1379 = scalar_lea.sflag [#allocation5], %s1378
        %s1380 = sand.u32 %s141, 1
        %s1381 = smul.addr %s1380, 16
        %s1382 = scalar_lea.vmem [#allocation6], %s1381
        // Predicated region
        $region45: #{tpu_custom_call.1} parent=39 // pred_check
          %p1383 = pneg %p151
        $region46: #{tpu_custom_call.1} parent=39 // pred_check_branch
          %1385 = sbr.rel (%p1383) target = $region48
        $region47: #{tpu_custom_call.1} parent=39 // pred_region
          %s1386 = smul.u32 16, %s23
          %1388 = vsyncadd %s1379, 0
          %s1389 = scalar_lea.hbm %s5, %s1386
          %s1391 = sshll.u32 %s1382, 4
          %s1392 = int_to_ptr.vmem [resolvable:$true] %s1391
          %s1393 = sshll.u32 %s1389, 4
          %s1394 = int_to_ptr.hbm [resolvable:$true] %s1393
          %1396 = dma.vmem_to_hbm [thread:$0]  %s1392, 256, %s1394, %s1379
        $region48: #{tpu_custom_call.1} parent=39 // pred_fallthru
          _
      $region40: #{tpu_custom_call.1} parent=5 // pred_fallthru
        _
      %p1397 = scmp.le.s32.totalorder 2, %s18
      // Predicated region
      $region49: #{tpu_custom_call.1} parent=5 // pred_check
        %p1398 = pneg %p1397
      $region50: #{tpu_custom_call.1} parent=5 // pred_check_branch
        %1400 = sbr.rel (%p1398) target = $region52
      $region51: #{tpu_custom_call.1} parent=5 // pred_region
        %s1401 = ssub.s32 %s18, 2
        // Predicated region
        $region53: #{tpu_custom_call.1} parent=51 // pred_check
          %p1402 = pneg %p157
        $region54: #{tpu_custom_call.1} parent=51 // pred_check_branch
          %1404 = sbr.rel (%p1402) target = $region56
        $region55: #{tpu_custom_call.1} parent=51 // pred_region
          %s1405 = sand.u32 %s142, 1
          %s1406 = scalar_lea.sflag [#allocation5], %s1405
          %s1407 = sand.u32 %s142, 1
          %s1408 = smul.addr %s1407, 16
          %s1409 = scalar_lea.vmem [#allocation6], %s1408
          %1411 = dma.done %s1406, 256
        $region56: #{tpu_custom_call.1} parent=51 // pred_fallthru
          _
      $region52: #{tpu_custom_call.1} parent=5 // pred_fallthru
        _
    $region6: #{tpu_custom_call.1} parent=1 // loop_footer
      %s22 = sadd.s32 1, %s18
    $region7: #{tpu_custom_call.1} parent=1 // loop_footer_branch
      %17 = sbr.rel target = $region3
    $region8: #{tpu_custom_call.1} parent=1 // loop_exit
      _
    %1412 = vsyncpa [#allocation4], 1
    %s1413 = scalar_lea.sflag [#allocation4], 1
    %1414 = vsyncpa %s1413, 1
    %1415 = vsyncpa [#allocation5], 1
    %s1416 = scalar_lea.sflag [#allocation5], 1
    %1417 = vsyncpa %s1416, 1

</llo_original>
